<compile_context>
chip_gen: v7x
topology: tpu7x:2x2x1
jax: 0.10.0
libtpu: 0.0.40
codegen_flags: <defaults>
</compile_context>

<pallas_src>
import jax
import jax.numpy as jnp
from jax.experimental import pallas as pl
from jax.experimental.pallas import tpu as pltpu


ROW_ALIGN = 16                      # multiple of 8 (f32) and 16 (bf16) sublanes
VMEM_LIMIT_BYTES = 32 * 1024 * 1024


def _round_up(x, m):
    return (x + m - 1) // m * m


def _cdiv(a, b):
    return (a + b - 1) // b


def _choose_tile_m(M, tile_m_max, min_grid_steps=2):
    """Largest ROW_ALIGN-multiple tile <= tile_m_max; keep >= min_grid_steps
    grid steps when there is enough work (v7x megacore; harmless elsewhere)."""
    Ma = _round_up(max(M, 1), ROW_ALIGN)
    tile = min(max(ROW_ALIGN, _round_up(tile_m_max, ROW_ALIGN)), Ma)
    if Ma >= min_grid_steps * ROW_ALIGN:
        tile = min(tile, _round_up(_cdiv(Ma, min_grid_steps), ROW_ALIGN))
    return tile


def _const_spec(block_shape, single_buffer):
    """BlockSpec with a constant index map (block stays VMEM-resident)."""
    index_map = lambda *_: (0,) * len(block_shape)
    if single_buffer and hasattr(pl, "Buffered"):
        # Constant-index blocks never change -> one buffer is enough.
        return pl.BlockSpec(block_shape, index_map, pipeline_mode=pl.Buffered(1))
    return pl.BlockSpec(block_shape, index_map)


def _maybe_single_buffer(run):
    """Attempt single-buffered constant weight blocks; fall back to the default
    double-buffered specs if pipeline_mode=pl.Buffered(1) is unsupported."""
    try:
        return run(True)
    except Exception:
        return run(False)


# ----------------------------------------------------------------------------
# Kernels
# ----------------------------------------------------------------------------
def gru_cell_kernel(xh_ref, w_ref, bi_ref, bhn_ref, out_ref):
    # xh_ref : [TILE_M, P + n_in]  columns = [ h (zero-padded to P) | x ]
    # w_ref  : [P + n_in, 4P]      column blocks [ r | z | n_x | n_h ]
    # bi_ref : [1, 4P]  f32        [ b_ir+b_hr | b_iz+b_hz | b_in | 0 ]
    # bhn_ref: [1, P]   f32        b_hn (must stay inside r * (...))
    # out_ref: [TILE_M, P]         lane-dense padded h_t
    P = bhn_ref.shape[-1]

    xh = xh_ref[...]
    # One MXU matmul (K = P + n_in <= 256 -> a single weight-load pass on the
    # 256-deep v6e/v7x MXUs) with f32 accumulation; the r/z "gi + gh" adds are
    # folded into the accumulation.
    g = jnp.dot(xh, w_ref[...], preferred_element_type=jnp.float32) + bi_ref[...]

    # Gate math in f32 (v5e has no bf16 VPU/EUP).
    # TODO(synk): on v7x the single EUP (2 sigmoids + 1 tanh per tile) becomes
    # the binding unit once streaming is bf16; bf16 nonlinearities would help
    # there but regress v5e -- switch only after profiling.
    r = jax.nn.sigmoid(g[:, 0 * P:1 * P])
    z = jax.nn.sigmoid(g[:, 1 * P:2 * P])
    n = jnp.tanh(g[:, 2 * P:3 * P] + r * (g[:, 3 * P:4 * P] + bhn_ref[...]))

    h_prev = xh[:, :P].astype(jnp.float32)     # 128-lane-aligned slice
    h_t = n + z * (h_prev - n)                 # == (1 - z) * n + z * h
    out_ref[...] = h_t.astype(out_ref.dtype)


def gru_seq_kernel(x_ref, h0_ref, w_ref, bi_ref, bhn_ref, out_ref, h_scr):
    # grid = (M tiles, T); h carried across t in a per-tile f32 VMEM scratch.
    # x_ref : [1, TILE_M, n_in]   h0_ref: [TILE_M, P]   out_ref: [1, TILE_M, P]
    P = bhn_ref.shape[-1]
    t = pl.program_id(1)

    @pl.when(t == 0)
    def _():
        h_scr[...] = h0_ref[...].astype(jnp.float32)

    w = w_ref[...]                              # [P + n_in, 4P]
    h_prev = h_scr[...]                         # f32
    x = x_ref[0]                                # [TILE_M, n_in]

    g = (jnp.dot(h_prev.astype(w.dtype), w[:P, :],
                 preferred_element_type=jnp.float32)
         + jnp.dot(x, w[P:, :], preferred_element_type=jnp.float32)
         + bi_ref[...])

    r = jax.nn.sigmoid(g[:, 0 * P:1 * P])
    z = jax.nn.sigmoid(g[:, 1 * P:2 * P])
    n = jnp.tanh(g[:, 2 * P:3 * P] + r * (g[:, 3 * P:4 * P] + bhn_ref[...]))

    h_t = n + z * (h_prev - n)
    h_scr[...] = h_t                            # stays in VMEM for step t + 1
    out_ref[0] = h_t.astype(out_ref.dtype)


# ----------------------------------------------------------------------------
# One-time parameter packing
# ----------------------------------------------------------------------------
def pack_gru_params(params, stream_dtype=jnp.bfloat16, n_h_pad=None):
    """Pack the six Linear layers into one fused, lane-aligned weight.

    Layout: W [P + n_in, 4P], rows = [ h-rows (P) ; x-rows (n_in) ],
    column blocks = [ r | z | n_x | n_h ] (each padded to P = 128 lanes).
    Biases stay f32; b_ir+b_hr and b_iz+b_hz are pre-summed, b_hn kept apart.
    """
    n_h, n_in = params["w_ir"].shape
    P = n_h_pad if n_h_pad is not None else max(128, _round_up(n_h, 128))

    def gate_cols(w_h, w_x):            # -> [P + n_in, P]
        h_rows = (jnp.zeros((P, P), jnp.float32) if w_h is None else
                  jnp.pad(w_h.T.astype(jnp.float32),
                          ((0, P - n_h), (0, P - n_h))))
        x_rows = (jnp.zeros((n_in, P), jnp.float32) if w_x is None else
                  jnp.pad(w_x.T.astype(jnp.float32), ((0, 0), (0, P - n_h))))
        return jnp.concatenate([h_rows, x_rows], axis=0)

    w = jnp.concatenate(
        [gate_cols(params["w_hr"], params["w_ir"]),   # r
         gate_cols(params["w_hz"], params["w_iz"]),   # z
         gate_cols(None, params["w_in"]),             # n (x half)
         gate_cols(params["w_hn"], None)],            # n (h half, gated by r)
        axis=1).astype(stream_dtype)                  # [P + n_in, 4P]

    def pad_bias(b):
        return jnp.pad(b.astype(jnp.float32), (0, P - n_h))

    bi = jnp.concatenate(
        [pad_bias(params["b_ir"] + params["b_hr"]),
         pad_bias(params["b_iz"] + params["b_hz"]),
         pad_bias(params["b_in"]),
         jnp.zeros((P,), jnp.float32)]).reshape(1, 4 * P)
    bhn = pad_bias(params["b_hn"]).reshape(1, P)

    return {"w": w, "bi": bi, "bhn": bhn, "n_h": n_h, "n_in": n_in,
            "n_h_pad": P, "stream_dtype": stream_dtype}


# ----------------------------------------------------------------------------
# Wrappers
# ----------------------------------------------------------------------------
def gru_cell_forward(X, h, packed, tile_m_max=1024):
    """Single GRU step.  X: [B, N, n_in], h: [B, N, n_h] -> h_t: [B, N, n_h]."""
    B, N, n_in = X.shape
    n_h = h.shape[-1]
    P = packed["n_h_pad"]
    K = P + n_in
    sdt = packed["stream_dtype"]
    M = B * N

    TILE_M = _choose_tile_m(M, tile_m_max)
    M_pad = _round_up(M, TILE_M)
    grid = (M_pad // TILE_M,)

    # Single streaming operand [h_pad | x]: the kernel's h slice starts at lane
    # 0 (128-aligned) and one K = P + n_in matmul covers every gate.
    # (Note: this layout precludes input_output_aliases on h; the sequence
    # kernel below removes the h HBM round trip entirely instead.)
    h_p = jnp.pad(h.reshape(M, n_h).astype(sdt), ((0, M_pad - M), (0, P - n_h)))
    x_p = jnp.pad(X.reshape(M, n_in).astype(sdt), ((0, M_pad - M), (0, 0)))
    xh = jnp.concatenate([h_p, x_p], axis=1)          # [M_pad, K]

    itemsize = jnp.dtype(sdt).itemsize
    cost = pl.CostEstimate(
        flops=int(2 * M_pad * K * 4 * P),
        transcendentals=int(3 * M_pad * P),
        bytes_accessed=int(itemsize * (M_pad * K + M_pad * P + K * 4 * P)
                           + 4 * 5 * P))

    def run(single_buffer):
        return pl.pallas_call(
            gru_cell_kernel,
            out_shape=jax.ShapeDtypeStruct((M_pad, P), sdt),
            grid=grid,
            in_specs=[
                pl.BlockSpec((TILE_M, K), lambda i: (i, 0)),     # [h|x] tile
                _const_spec((K, 4 * P), single_buffer),          # fused weights
                _const_spec((1, 4 * P), single_buffer),          # fused biases
                _const_spec((1, P), single_buffer),              # b_hn
            ],
            out_specs=pl.BlockSpec((TILE_M, P), lambda i: (i, 0)),
            compiler_params=pltpu.CompilerParams(
                dimension_semantics=("parallel",),
                vmem_limit_bytes=VMEM_LIMIT_BYTES),
            cost_estimate=cost,
        )(xh, packed["w"], packed["bi"], packed["bhn"])

    out = _maybe_single_buffer(run)
    return out[:M, :n_h].reshape(B, N, n_h)


def gru_sequence_forward(X_seq, h0, packed, tile_m_max=1024):
    """Time-fused GRU: X_seq [T, B, N, n_in], h0 [B, N, n_h] -> [T, B, N, n_h]."""
    T, B, N, n_in = X_seq.shape
    n_h = h0.shape[-1]
    P = packed["n_h_pad"]
    K = P + n_in
    sdt = packed["stream_dtype"]
    M = B * N

    TILE_M = _choose_tile_m(M, tile_m_max)
    M_pad = _round_up(M, TILE_M)
    grid = (M_pad // TILE_M, T)        # reduction-like (recurrent) axis last

    x_p = jnp.pad(X_seq.reshape(T, M, n_in).astype(sdt),
                  ((0, 0), (0, M_pad - M), (0, 0)))
    h_p = jnp.pad(h0.reshape(M, n_h).astype(sdt),
                  ((0, M_pad - M), (0, P - n_h)))

    itemsize = jnp.dtype(sdt).itemsize
    cost = pl.CostEstimate(
        flops=int(2 * T * M_pad * K * 4 * P),
        transcendentals=int(3 * T * M_pad * P),
        bytes_accessed=int(itemsize * (T * M_pad * (n_in + P) + M_pad * P
                                       + K * 4 * P) + 4 * 5 * P))

    def run(single_buffer):
        return pl.pallas_call(
            gru_seq_kernel,
            out_shape=jax.ShapeDtypeStruct((T, M_pad, P), sdt),
            grid=grid,
            in_specs=[
                pl.BlockSpec((1, TILE_M, n_in), lambda i, t: (t, i, 0)),  # x_t
                pl.BlockSpec((TILE_M, P), lambda i, t: (i, 0)),           # h0
                _const_spec((K, 4 * P), single_buffer),
                _const_spec((1, 4 * P), single_buffer),
                _const_spec((1, P), single_buffer),
            ],
            out_specs=pl.BlockSpec((1, TILE_M, P), lambda i, t: (t, i, 0)),
            scratch_shapes=[pltpu.VMEM((TILE_M, P), jnp.float32)],
            compiler_params=pltpu.CompilerParams(
                dimension_semantics=("parallel", "arbitrary"),
                vmem_limit_bytes=VMEM_LIMIT_BYTES),
            cost_estimate=cost,
        )(x_p, h_p, packed["w"], packed["bi"], packed["bhn"])

    out = _maybe_single_buffer(run)
    return out[:, :M, :n_h].reshape(T, B, N, n_h)


# ----------------------------------------------------------------------------
# Reference + init (for validation)
# ----------------------------------------------------------------------------
def init_params(key, n_in, n_h):
    """Deterministic init mimicking nn.Linear's uniform(+-1/sqrt(fan_in))."""
    names_fan = [
        ("w_ir", (n_h, n_in), n_in), ("b_ir", (n_h,), n_in),
        ("w_hr", (n_h, n_h), n_h),  ("b_hr", (n_h,), n_h),
        ("w_iz", (n_h, n_in), n_in), ("b_iz", (n_h,), n_in),
        ("w_hz", (n_h, n_h), n_h),  ("b_hz", (n_h,), n_h),
        ("w_in", (n_h, n_in), n_in), ("b_in", (n_h,), n_in),
        ("w_hn", (n_h, n_h), n_h),  ("b_hn", (n_h,), n_h),
    ]
    params = {}
    keys = jax.random.split(key, len(names_fan))
    for (name, shape, fan_in), k in zip(names_fan, keys):
        bound = 1.0 / (fan_in ** 0.5)
        params[name] = jax.random.uniform(
            k, shape, dtype=jnp.float32, minval=-bound, maxval=bound)
    return params


def gru_cell_reference(X, h, params):
    """Plain-JAX reference of the PyTorch GRUCell forward."""
    def lin(x, w, b):
        return jnp.einsum("bnf,of->bno", x, w) + b
    r = jax.nn.sigmoid(lin(X, params["w_ir"], params["b_ir"]) +
                       lin(h, params["w_hr"], params["b_hr"]))
    z = jax.nn.sigmoid(lin(X, params["w_iz"], params["b_iz"]) +
                       lin(h, params["w_hz"], params["b_hz"]))
    n = jnp.tanh(lin(X, params["w_in"], params["b_in"]) +
                 r * lin(h, params["w_hn"], params["b_hn"]))
    return (1.0 - z) * n + z * h


def gru_sequence_reference(X_seq, h0, params):
    def step(h, x):
        h_next = gru_cell_reference(x, h, params)
        return h_next, h_next
    _, hs = jax.lax.scan(step, h0, X_seq)
    return hs


if __name__ == "__main__":
    n_in, n_h = 16, 32
    B, N, T = 2, 8, 5            # batch_size, num_objects, timesteps

    key = jax.random.PRNGKey(0)
    k_params, k_x, k_h, k_xs = jax.random.split(key, 4)

    params = init_params(k_params, n_in, n_h)

    X = jax.random.normal(k_x, (B, N, n_in), dtype=jnp.float32)
    h = jax.random.normal(k_h, (B, N, n_h), dtype=jnp.float32)
    X_seq = jax.random.normal(k_xs, (T, B, N, n_in), dtype=jnp.float32)

    # ---- single-step kernel, f32 streaming (tight tolerance) ----
    packed_f32 = pack_gru_params(params, stream_dtype=jnp.float32)
    h_t = jax.block_until_ready(gru_cell_forward(X, h, packed_f32))
    h_ref = jax.block_until_ready(gru_cell_reference(X, h, params))
    assert h_t.shape == (B, N, n_h)
    assert jnp.allclose(h_t, h_ref, atol=1e-5, rtol=1e-5)

    # ---- single-step kernel, bf16 streaming (default fast path) ----
    packed_bf16 = pack_gru_params(params)          # stream_dtype = bfloat16
    h_bf = jax.block_until_ready(gru_cell_forward(X, h, packed_bf16))
    h_bf = h_bf.astype(jnp.float32)
    # Reference with identically bf16-rounded weights/activations (biases stay
    # f32 in the kernel): residual diff is output rounding + accumulation order.
    rt = lambda a: a.astype(jnp.bfloat16).astype(jnp.float32)
    params_rt = dict(params)
    for name in ("w_ir", "w_hr", "w_iz", "w_hz", "w_in", "w_hn"):
        params_rt[name] = rt(params[name])
    h_ref_bf = jax.block_until_ready(gru_cell_reference(rt(X), rt(h), params_rt))
    assert h_bf.shape == (B, N, n_h)
    assert jnp.allclose(h_bf, h_ref_bf, atol=2e-2, rtol=2e-2)

    # ---- time-fused sequence kernel (f32 streaming) vs lax.scan reference ----
    hs = jax.block_until_ready(gru_sequence_forward(X_seq, h, packed_f32))
    hs_ref = jax.block_until_ready(gru_sequence_reference(X_seq, h, params))
    assert hs.shape == (T, B, N, n_h)
    assert jnp.allclose(hs, hs_ref, atol=1e-3, rtol=1e-3)

    print("KERNEL_OK")
</pallas_src>

<mosaic_0001>
module attributes {stable_mosaic.version = 11 : i64} {
  func.func @gru_cell_kernel(%arg0: i32, %arg1: memref<16x144xf32, #tpu.memory_space<vmem>>, %arg2: memref<144x512xf32, #tpu.memory_space<vmem>>, %arg3: memref<1x512xf32, #tpu.memory_space<vmem>>, %arg4: memref<1x128xf32, #tpu.memory_space<vmem>>, %arg5: memref<16x128xf32, #tpu.memory_space<vmem>>) attributes {dimension_semantics = [#tpu.dimension_semantics<parallel>], iteration_bounds = array<i64: 1>, scalar_prefetch = 0 : i64, scratch_operands = 0 : i64, tpu.core_type = #tpu.core_type<tc>, window_params = [{transform_indices = @transform_0, window_bounds = array<i64: 16, 144>}, {pipeline_mode = #tpu.pipeline_mode<synchronous>, transform_indices = @transform_1, window_bounds = array<i64: 144, 512>}, {pipeline_mode = #tpu.pipeline_mode<synchronous>, transform_indices = @transform_2, window_bounds = array<i64: 1, 512>}, {pipeline_mode = #tpu.pipeline_mode<synchronous>, transform_indices = @transform_3, window_bounds = array<i64: 1, 128>}, {transform_indices = @transform_4, window_bounds = array<i64: 16, 128>}]} {
    %c0 = arith.constant 0 : index
    %c0_0 = arith.constant 0 : index
    %0 = vector.load %arg1[%c0, %c0_0] : memref<16x144xf32, #tpu.memory_space<vmem>>, vector<16x144xf32>
    %c0_1 = arith.constant 0 : index
    %c0_2 = arith.constant 0 : index
    %1 = vector.load %arg2[%c0_1, %c0_2] : memref<144x512xf32, #tpu.memory_space<vmem>>, vector<144x512xf32>
    %cst = arith.constant dense<0.000000e+00> : vector<16x512xf32>
    %2 = tpu.matmul %0, %1, %cst {dimension_numbers = #tpu.dot_dimension_numbers<[1], [0], [0], [1], [0, 0, 1, 1], [], []>} : vector<16x144xf32>, vector<144x512xf32>, vector<16x512xf32> -> vector<16x512xf32>
    %c0_3 = arith.constant 0 : index
    %c0_4 = arith.constant 0 : index
    %3 = vector.load %arg3[%c0_3, %c0_4] : memref<1x512xf32, #tpu.memory_space<vmem>>, vector<1x512xf32>
    %4 = vector.broadcast %3 : vector<1x512xf32> to vector<16x512xf32>
    %5 = arith.addf %2, %4 : vector<16x512xf32>
    %6 = vector.extract_strided_slice %5 {offsets = [0, 0], sizes = [16, 128], strides = [1, 1]} : vector<16x512xf32> to vector<16x128xf32>
    %7 = arith.negf %6 : vector<16x128xf32>
    %8 = math.exp %7 : vector<16x128xf32>
    %cst_5 = arith.constant 1.000000e+00 : f32
    %9 = vector.broadcast %cst_5 : f32 to vector<16x128xf32>
    %10 = arith.addf %9, %8 : vector<16x128xf32>
    %11 = arith.divf %9, %10 : vector<16x128xf32>
    %12 = vector.extract_strided_slice %5 {offsets = [0, 128], sizes = [16, 128], strides = [1, 1]} : vector<16x512xf32> to vector<16x128xf32>
    %13 = arith.negf %12 : vector<16x128xf32>
    %14 = math.exp %13 : vector<16x128xf32>
    %cst_6 = arith.constant 1.000000e+00 : f32
    %15 = vector.broadcast %cst_6 : f32 to vector<16x128xf32>
    %16 = arith.addf %15, %14 : vector<16x128xf32>
    %17 = arith.divf %15, %16 : vector<16x128xf32>
    %18 = vector.extract_strided_slice %5 {offsets = [0, 256], sizes = [16, 128], strides = [1, 1]} : vector<16x512xf32> to vector<16x128xf32>
    %19 = vector.extract_strided_slice %5 {offsets = [0, 384], sizes = [16, 128], strides = [1, 1]} : vector<16x512xf32> to vector<16x128xf32>
    %c0_7 = arith.constant 0 : index
    %c0_8 = arith.constant 0 : index
    %20 = vector.load %arg4[%c0_7, %c0_8] : memref<1x128xf32, #tpu.memory_space<vmem>>, vector<1x128xf32>
    %21 = vector.broadcast %20 : vector<1x128xf32> to vector<16x128xf32>
    %22 = arith.addf %19, %21 : vector<16x128xf32>
    %23 = arith.mulf %11, %22 : vector<16x128xf32>
    %24 = arith.addf %18, %23 : vector<16x128xf32>
    %25 = math.tanh %24 : vector<16x128xf32>
    %26 = vector.extract_strided_slice %0 {offsets = [0, 0], sizes = [16, 128], strides = [1, 1]} : vector<16x144xf32> to vector<16x128xf32>
    %27 = arith.subf %26, %25 : vector<16x128xf32>
    %28 = arith.mulf %17, %27 : vector<16x128xf32>
    %29 = arith.addf %25, %28 : vector<16x128xf32>
    %c0_9 = arith.constant 0 : index
    %c0_10 = arith.constant 0 : index
    %30 = vector.load %arg5[%c0_9, %c0_10] : memref<16x128xf32, #tpu.memory_space<vmem>>, vector<16x128xf32>
    tpu.vector_store %arg5[%c0_9, %c0_10], %29 {strides = array<i32>} : memref<16x128xf32, #tpu.memory_space<vmem>>, vector<16x128xf32>,
    return
  }
  func.func @transform_0(%arg0: i32) -> (i32, i32) {
    %c0_i32 = arith.constant 0 : i32
    %c0_i32_0 = arith.constant 0 : i32
    return %arg0, %c0_i32 : i32, i32
  }
  func.func @transform_1(%arg0: i32) -> (i32, i32) {
    %c0_i32 = arith.constant 0 : i32
    %c0_i32_0 = arith.constant 0 : i32
    %c0_i32_1 = arith.constant 0 : i32
    return %c0_i32, %c0_i32_0 : i32, i32
  }
  func.func @transform_2(%arg0: i32) -> (i32, i32) {
    %c0_i32 = arith.constant 0 : i32
    %c0_i32_0 = arith.constant 0 : i32
    %c0_i32_1 = arith.constant 0 : i32
    return %c0_i32, %c0_i32_0 : i32, i32
  }
  func.func @transform_3(%arg0: i32) -> (i32, i32) {
    %c0_i32 = arith.constant 0 : i32
    %c0_i32_0 = arith.constant 0 : i32
    %c0_i32_1 = arith.constant 0 : i32
    return %c0_i32, %c0_i32_0 : i32, i32
  }
  func.func @transform_4(%arg0: i32) -> (i32, i32) {
    %c0_i32 = arith.constant 0 : i32
    %c0_i32_0 = arith.constant 0 : i32
    return %arg0, %c0_i32 : i32, i32
  }
}

module attributes {stable_mosaic.version = 11 : i64} {
  func.func @gru_cell_kernel(%arg0: i32, %arg1: memref<16x144xf32, #tpu.memory_space<vmem>>, %arg2: memref<144x512xf32, #tpu.memory_space<vmem>>, %arg3: memref<1x512xf32, #tpu.memory_space<vmem>>, %arg4: memref<1x128xf32, #tpu.memory_space<vmem>>, %arg5: memref<16x128xf32, #tpu.memory_space<vmem>>) attributes {dimension_semantics = [#tpu.dimension_semantics<parallel>], iteration_bounds = array<i64: 1>, scalar_prefetch = 0 : i64, scratch_operands = 0 : i64, tpu.core_type = #tpu.core_type<tc>, window_params = [{transform_indices = @transform_0, window_bounds = array<i64: 16, 144>}, {pipeline_mode = #tpu.pipeline_mode<synchronous>, transform_indices = @transform_1, window_bounds = array<i64: 144, 512>}, {pipeline_mode = #tpu.pipeline_mode<synchronous>, transform_indices = @transform_2, window_bounds = array<i64: 1, 512>}, {pipeline_mode = #tpu.pipeline_mode<synchronous>, transform_indices = @transform_3, window_bounds = array<i64: 1, 128>}, {transform_indices = @transform_4, window_bounds = array<i64: 16, 128>}]} {
    %c0 = arith.constant 0 : index
    %c0_0 = arith.constant 0 : index
    %0 = vector.load %arg1[%c0, %c0_0] : memref<16x144xf32, #tpu.memory_space<vmem>>, vector<16x144xf32>
    %c0_1 = arith.constant 0 : index
    %c0_2 = arith.constant 0 : index
    %1 = vector.load %arg2[%c0_1, %c0_2] : memref<144x512xf32, #tpu.memory_space<vmem>>, vector<144x512xf32>
    %cst = arith.constant dense<0.000000e+00> : vector<16x512xf32>
    %2 = tpu.matmul %0, %1, %cst {dimension_numbers = #tpu.dot_dimension_numbers<[1], [0], [0], [1], [0, 0, 1, 1], [], []>} : vector<16x144xf32>, vector<144x512xf32>, vector<16x512xf32> -> vector<16x512xf32>
    %c0_3 = arith.constant 0 : index
    %c0_4 = arith.constant 0 : index
    %3 = vector.load %arg3[%c0_3, %c0_4] : memref<1x512xf32, #tpu.memory_space<vmem>>, vector<1x512xf32>
    %4 = vector.broadcast %3 : vector<1x512xf32> to vector<16x512xf32>
    %5 = arith.addf %2, %4 : vector<16x512xf32>
    %6 = vector.extract_strided_slice %5 {offsets = [0, 0], sizes = [16, 128], strides = [1, 1]} : vector<16x512xf32> to vector<16x128xf32>
    %7 = arith.negf %6 : vector<16x128xf32>
    %8 = math.exp %7 : vector<16x128xf32>
    %cst_5 = arith.constant 1.000000e+00 : f32
    %9 = vector.broadcast %cst_5 : f32 to vector<16x128xf32>
    %10 = arith.addf %9, %8 : vector<16x128xf32>
    %11 = arith.divf %9, %10 : vector<16x128xf32>
    %12 = vector.extract_strided_slice %5 {offsets = [0, 128], sizes = [16, 128], strides = [1, 1]} : vector<16x512xf32> to vector<16x128xf32>
    %13 = arith.negf %12 : vector<16x128xf32>
    %14 = math.exp %13 : vector<16x128xf32>
    %cst_6 = arith.constant 1.000000e+00 : f32
    %15 = vector.broadcast %cst_6 : f32 to vector<16x128xf32>
    %16 = arith.addf %15, %14 : vector<16x128xf32>
    %17 = arith.divf %15, %16 : vector<16x128xf32>
    %18 = vector.extract_strided_slice %5 {offsets = [0, 256], sizes = [16, 128], strides = [1, 1]} : vector<16x512xf32> to vector<16x128xf32>
    %19 = vector.extract_strided_slice %5 {offsets = [0, 384], sizes = [16, 128], strides = [1, 1]} : vector<16x512xf32> to vector<16x128xf32>
    %c0_7 = arith.constant 0 : index
    %c0_8 = arith.constant 0 : index
    %20 = vector.load %arg4[%c0_7, %c0_8] : memref<1x128xf32, #tpu.memory_space<vmem>>, vector<1x128xf32>
    %21 = vector.broadcast %20 : vector<1x128xf32> to vector<16x128xf32>
    %22 = arith.addf %19, %21 : vector<16x128xf32>
    %23 = arith.mulf %11, %22 : vector<16x128xf32>
    %24 = arith.addf %18, %23 : vector<16x128xf32>
    %25 = math.tanh %24 : vector<16x128xf32>
    %26 = vector.extract_strided_slice %0 {offsets = [0, 0], sizes = [16, 128], strides = [1, 1]} : vector<16x144xf32> to vector<16x128xf32>
    %27 = arith.subf %26, %25 : vector<16x128xf32>
    %28 = arith.mulf %17, %27 : vector<16x128xf32>
    %29 = arith.addf %25, %28 : vector<16x128xf32>
    %c0_9 = arith.constant 0 : index
    %c0_10 = arith.constant 0 : index
    %30 = vector.load %arg5[%c0_9, %c0_10] : memref<16x128xf32, #tpu.memory_space<vmem>>, vector<16x128xf32>
    tpu.vector_store %arg5[%c0_9, %c0_10], %29 {strides = array<i32>} : memref<16x128xf32, #tpu.memory_space<vmem>>, vector<16x128xf32>,
    return
  }
  func.func @transform_0(%arg0: i32) -> (i32, i32) {
    %c0_i32 = arith.constant 0 : i32
    %c0_i32_0 = arith.constant 0 : i32
    return %arg0, %c0_i32 : i32, i32
  }
  func.func @transform_1(%arg0: i32) -> (i32, i32) {
    %c0_i32 = arith.constant 0 : i32
    %c0_i32_0 = arith.constant 0 : i32
    %c0_i32_1 = arith.constant 0 : i32
    return %c0_i32, %c0_i32_0 : i32, i32
  }
  func.func @transform_2(%arg0: i32) -> (i32, i32) {
    %c0_i32 = arith.constant 0 : i32
    %c0_i32_0 = arith.constant 0 : i32
    %c0_i32_1 = arith.constant 0 : i32
    return %c0_i32, %c0_i32_0 : i32, i32
  }
  func.func @transform_3(%arg0: i32) -> (i32, i32) {
    %c0_i32 = arith.constant 0 : i32
    %c0_i32_0 = arith.constant 0 : i32
    %c0_i32_1 = arith.constant 0 : i32
    return %c0_i32, %c0_i32_0 : i32, i32
  }
  func.func @transform_4(%arg0: i32) -> (i32, i32) {
    %c0_i32 = arith.constant 0 : i32
    %c0_i32_0 = arith.constant 0 : i32
    return %arg0, %c0_i32 : i32, i32
  }
}

</mosaic_0001>

<llo_original>
// kernel: tpu_custom_call.1
$region0: #{tpu_custom_call.1}
  #allocation0 [shape = 'u32[]', space=smem, size = 0x4, offset = 0x4, fixed_abs, tag = 'smem constant byte address 0x4 - core index']
  #allocation1 [shape = 'u32[144,128]{1,0:T(1,128)}', space=vmem, size = 0x12000, scoped, tag = 'internal scratch']
  %s0 = inlined_call_operand.hbm [shape: f32[16,144], index: 0, kind: input, shape index: {}]
  %s1 = inlined_call_operand.hbm [shape: f32[144,512], index: 1, kind: input, shape index: {}]
  %s2 = inlined_call_operand.vmem [shape: f32[1,512], index: 2, kind: input, shape index: {}]
  %s3 = inlined_call_operand.vmem [shape: f32[1,128], index: 3, kind: input, shape index: {}]
  %s4 = inlined_call_operand.hbm [shape: f32[16,128], index: 4, kind: output, shape index: {}]
  %s5 = sld [smem:[#allocation0]]
  $region34: #{tpu_custom_call.1} parent=0
    _
  %s7 = ssub.s32 1, %s5
  %s8 = scalar_select 0, %s7, %s5
  $region1: #{tpu_custom_call.1} parent=0
    #allocation2 [shape = 'u8[16384]{0}', space=vmem, size = 0x4000, scoped, tag = 'input window, operand 0, single buffered']
    #allocation3 [shape = 's32[1]{0}', space=sflag, size = 0x4, scoped, tag = 'scoped memory for tpu_custom_call.1']
    #allocation4 [shape = 's32[1]{0}', space=sflag, size = 0x4, scoped, tag = 'scoped memory for tpu_custom_call.1']
    #allocation5 [shape = 'u8[294912]{0}', space=vmem, size = 0x48000, scoped, tag = 'input window, operand 1, single buffered']
    #allocation6 [shape = 's32[1]{0}', space=sflag, size = 0x4, scoped, tag = 'scoped memory for tpu_custom_call.1']
    #allocation7 [shape = 'u8[8192]{0}', space=vmem, size = 0x2000, scoped, tag = 'output window, operand 0, single buffered']
    %9 = vsyncpa [#allocation3], 0
    %10 = vsyncpa [#allocation6], 0
    %11 = vsyncpa [#allocation4], 0
    // Predicated region
    $region2: #{tpu_custom_call.1} parent=1 // pred_check
      _
    $region3: #{tpu_custom_call.1} parent=1 // pred_check_branch
      %13 = sbr.rel (0) target = $region5
    $region4: #{tpu_custom_call.1} parent=1 // pred_region
      %s15 = ssub.s32 512, 512
      %16 = vsyncadd [#allocation3], %s15
      %s17 = sshll.u32 [#allocation2], 4
      %s18 = int_to_ptr.vmem [resolvable:$true] %s17
      %23 = dma.hbm_to_vmem [thread:$0]  %s0, 512, %s18, [#allocation3], 256, 256, 16
    $region5: #{tpu_custom_call.1} parent=1 // pred_fallthru
      _
    // Predicated region
    $region6: #{tpu_custom_call.1} parent=1 // pred_check
      _
    $region7: #{tpu_custom_call.1} parent=1 // pred_check_branch
      %25 = sbr.rel (0) target = $region9
    $region8: #{tpu_custom_call.1} parent=1 // pred_region
      %s27 = ssub.s32 9216, 9216
      %28 = vsyncadd [#allocation6], %s27
      %s29 = sshll.u32 [#allocation5], 4
      %s30 = int_to_ptr.vmem [resolvable:$true] %s29
      %35 = dma.hbm_to_vmem [thread:$0]  %s1, 9216, %s30, [#allocation6], 512, 512, 32
    $region9: #{tpu_custom_call.1} parent=1 // pred_fallthru
      _
    // Predicated region
    $region10: #{tpu_custom_call.1} parent=1 // pred_check
      _
    $region11: #{tpu_custom_call.1} parent=1 // pred_check_branch
      %37 = sbr.rel (0) target = $region13
    $region12: #{tpu_custom_call.1} parent=1 // pred_region
      _
    $region13: #{tpu_custom_call.1} parent=1 // pred_fallthru
      _
    // Predicated region
    $region14: #{tpu_custom_call.1} parent=1 // pred_check
      _
    $region15: #{tpu_custom_call.1} parent=1 // pred_check_branch
      %39 = sbr.rel (0) target = $region17
    $region16: #{tpu_custom_call.1} parent=1 // pred_region
      _
    $region17: #{tpu_custom_call.1} parent=1 // pred_fallthru
      _
    // Predicated region
    $region18: #{tpu_custom_call.1} parent=1 // pred_check
      _
    $region19: #{tpu_custom_call.1} parent=1 // pred_check_branch
      %41 = sbr.rel (0) target = $region21
    $region20: #{tpu_custom_call.1} parent=1 // pred_region
      %42 = dma.done [#allocation3], 512
    $region21: #{tpu_custom_call.1} parent=1 // pred_fallthru
      _
    // Predicated region
    $region22: #{tpu_custom_call.1} parent=1 // pred_check
      _
    $region23: #{tpu_custom_call.1} parent=1 // pred_check_branch
      %44 = sbr.rel (0) target = $region25
    $region24: #{tpu_custom_call.1} parent=1 // pred_region
      %45 = dma.done [#allocation6], 9216
    $region25: #{tpu_custom_call.1} parent=1 // pred_fallthru
      _
    %v46 = vld [vmem:[#allocation2] sm:$0xff]
    %v47 = vld [vmem:[#allocation2 + $0x8] sm:$0xff]
    %v48 = vld [vmem:[#allocation2 + $0x10] sm:$0xff]
    %v49 = vld [vmem:[#allocation2 + $0x18] sm:$0xff]
    %v50 = vld [vmem:[#allocation5] sm:$0xff]
    %v51 = vld [vmem:[#allocation5 + $0x8] sm:$0xff]
    %v52 = vld [vmem:[#allocation5 + $0x10] sm:$0xff]
    %v53 = vld [vmem:[#allocation5 + $0x18] sm:$0xff]
    %v54 = vld [vmem:[#allocation5 + $0x20] sm:$0xff]
    %v55 = vld [vmem:[#allocation5 + $0x28] sm:$0xff]
    %v56 = vld [vmem:[#allocation5 + $0x30] sm:$0xff]
    %v57 = vld [vmem:[#allocation5 + $0x38] sm:$0xff]
    %v58 = vld [vmem:[#allocation5 + $0x40] sm:$0xff]
    %v59 = vld [vmem:[#allocation5 + $0x48] sm:$0xff]
    %v60 = vld [vmem:[#allocation5 + $0x50] sm:$0xff]
    %v61 = vld [vmem:[#allocation5 + $0x58] sm:$0xff]
    %v62 = vld [vmem:[#allocation5 + $0x60] sm:$0xff]
    %v63 = vld [vmem:[#allocation5 + $0x68] sm:$0xff]
    %v64 = vld [vmem:[#allocation5 + $0x70] sm:$0xff]
    %v65 = vld [vmem:[#allocation5 + $0x78] sm:$0xff]
    %v66 = vld [vmem:[#allocation5 + $0x80] sm:$0xff]
    %v67 = vld [vmem:[#allocation5 + $0x88] sm:$0xff]
    %v68 = vld [vmem:[#allocation5 + $0x90] sm:$0xff]
    %v69 = vld [vmem:[#allocation5 + $0x98] sm:$0xff]
    %v70 = vld [vmem:[#allocation5 + $0xa0] sm:$0xff]
    %v71 = vld [vmem:[#allocation5 + $0xa8] sm:$0xff]
    %v72 = vld [vmem:[#allocation5 + $0xb0] sm:$0xff]
    %v73 = vld [vmem:[#allocation5 + $0xb8] sm:$0xff]
    %v74 = vld [vmem:[#allocation5 + $0xc0] sm:$0xff]
    %v75 = vld [vmem:[#allocation5 + $0xc8] sm:$0xff]
    %v76 = vld [vmem:[#allocation5 + $0xd0] sm:$0xff]
    %v77 = vld [vmem:[#allocation5 + $0xd8] sm:$0xff]
    %v78 = vld [vmem:[#allocation5 + $0xe0] sm:$0xff]
    %v79 = vld [vmem:[#allocation5 + $0xe8] sm:$0xff]
    %v80 = vld [vmem:[#allocation5 + $0xf0] sm:$0xff]
    %v81 = vld [vmem:[#allocation5 + $0xf8] sm:$0xff]
    %v82 = vld [vmem:[#allocation5 + $0x100] sm:$0xff]
    %v83 = vld [vmem:[#allocation5 + $0x108] sm:$0xff]
    %v84 = vld [vmem:[#allocation5 + $0x110] sm:$0xff]
    %v85 = vld [vmem:[#allocation5 + $0x118] sm:$0xff]
    %v86 = vld [vmem:[#allocation5 + $0x120] sm:$0xff]
    %v87 = vld [vmem:[#allocation5 + $0x128] sm:$0xff]
    %v88 = vld [vmem:[#allocation5 + $0x130] sm:$0xff]
    %v89 = vld [vmem:[#allocation5 + $0x138] sm:$0xff]
    %v90 = vld [vmem:[#allocation5 + $0x140] sm:$0xff]
    %v91 = vld [vmem:[#allocation5 + $0x148] sm:$0xff]
    %v92 = vld [vmem:[#allocation5 + $0x150] sm:$0xff]
    %v93 = vld [vmem:[#allocation5 + $0x158] sm:$0xff]
    %v94 = vld [vmem:[#allocation5 + $0x160] sm:$0xff]
    %v95 = vld [vmem:[#allocation5 + $0x168] sm:$0xff]
    %v96 = vld [vmem:[#allocation5 + $0x170] sm:$0xff]
    %v97 = vld [vmem:[#allocation5 + $0x178] sm:$0xff]
    %v98 = vld [vmem:[#allocation5 + $0x180] sm:$0xff]
    %v99 = vld [vmem:[#allocation5 + $0x188] sm:$0xff]
    %v100 = vld [vmem:[#allocation5 + $0x190] sm:$0xff]
    %v101 = vld [vmem:[#allocation5 + $0x198] sm:$0xff]
    %v102 = vld [vmem:[#allocation5 + $0x1a0] sm:$0xff]
    %v103 = vld [vmem:[#allocation5 + $0x1a8] sm:$0xff]
    %v104 = vld [vmem:[#allocation5 + $0x1b0] sm:$0xff]
    %v105 = vld [vmem:[#allocation5 + $0x1b8] sm:$0xff]
    %v106 = vld [vmem:[#allocation5 + $0x1c0] sm:$0xff]
    %v107 = vld [vmem:[#allocation5 + $0x1c8] sm:$0xff]
    %v108 = vld [vmem:[#allocation5 + $0x1d0] sm:$0xff]
    %v109 = vld [vmem:[#allocation5 + $0x1d8] sm:$0xff]
    %v110 = vld [vmem:[#allocation5 + $0x1e0] sm:$0xff]
    %v111 = vld [vmem:[#allocation5 + $0x1e8] sm:$0xff]
    %v112 = vld [vmem:[#allocation5 + $0x1f0] sm:$0xff]
    %v113 = vld [vmem:[#allocation5 + $0x1f8] sm:$0xff]
    %v114 = vld [vmem:[#allocation5 + $0x200] sm:$0xff]
    %v115 = vld [vmem:[#allocation5 + $0x208] sm:$0xff]
    %v116 = vld [vmem:[#allocation5 + $0x210] sm:$0xff]
    %v117 = vld [vmem:[#allocation5 + $0x218] sm:$0xff]
    %v118 = vld [vmem:[#allocation5 + $0x220] sm:$0xff]
    %v119 = vld [vmem:[#allocation5 + $0x228] sm:$0xff]
    %v120 = vld [vmem:[#allocation5 + $0x230] sm:$0xff]
    %v121 = vld [vmem:[#allocation5 + $0x238] sm:$0xff]
    %v122 = vld [vmem:[%s2] sm:$0xf]
    %v124 = vlaneseq
    %v125 = vshrl.u32 %v124, 7
    %v126 = vsub.s32 0, %v125
    %v127 = vrot.slane %v122, %v126
    %v128 = vlaneseq
    %v129 = vshrl.u32 %v128, 7
    %v130 = vsub.s32 1, %v129
    %v131 = vrot.slane %v122, %v130
    %v132 = vlaneseq
    %v133 = vshrl.u32 %v132, 7
    %v134 = vsub.s32 2, %v133
    %v135 = vrot.slane %v122, %v134
    %v136 = vlaneseq
    %v137 = vshrl.u32 %v136, 7
    %v138 = vsub.s32 3, %v137
    %v139 = vrot.slane %v122, %v138
    %vm144 = vcmask 130048
    %v146 = vsel %vm144, %v47, 0
    %v149 = vsel %vm144, %v49, 0
    %151 = vmatprep.subr.mxu0 %v51
    %152 = vmatpush1.msra.mxu0 %v50
    %153 = vmatprep.subr.mxu0 %v55
    %154 = vmatpush1.msra.mxu0 %v54
    %155 = vmatprep.subr.mxu0 %v59
    %156 = vmatpush1.msra.mxu0 %v58
    %157 = vmatprep.subr.mxu0 %v63
    %158 = vmatpush1.msra.mxu0 %v62
    %159 = vmatprep.subr.mxu0 %v67
    %160 = vmatpush1.msra.mxu0 %v66
    %161 = vmatprep.subr.mxu0 %v71
    %162 = vmatpush1.msra.mxu0 %v70
    %163 = vmatprep.subr.mxu0 %v75
    %164 = vmatpush1.msra.mxu0 %v74
    %165 = vmatprep.subr.mxu0 %v79
    %166 = vmatpush1.msra.mxu0 %v78
    %167 = vmatprep.subr.mxu0 %v83
    %168 = vmatpush1.msra.mxu0 %v82
    %169 = vmatprep.subr.mxu0 %v87
    %170 = vmatpush1.msra.mxu0 %v86
    %171 = vmatprep.subr.mxu0 %v91
    %172 = vmatpush1.msra.mxu0 %v90
    %173 = vmatprep.subr.mxu0 %v95
    %174 = vmatpush1.msra.mxu0 %v94
    %175 = vmatprep.subr.mxu0 %v99
    %176 = vmatpush1.msra.mxu0 %v98
    %177 = vmatprep.subr.mxu0 %v103
    %178 = vmatpush1.msra.mxu0 %v102
    %179 = vmatprep.subr.mxu0 %v107
    %180 = vmatpush1.msra.mxu0 %v106
    %181 = vmatprep.subr.mxu0 %v111
    %182 = vmatpush1.msra.mxu0 %v110
    %183 = vmatprep.subr.mxu0 %v115
    %184 = vmatpush1.msra.mxu0 %v114
    %185 = vmatprep.subr.mxu0 %v119
    %186 = vmatpush1.msra.mxu0 %v118
    %187 = vmatprep.subr.mxu0 0.0
    %188 = vmatpush1.msra.mxu0 0.0
    %189 = vmatprep.subr.mxu0 0.0
    %190 = vmatpush1.msra.mxu0 0.0
    %191 = vmatprep.subr.mxu0 0.0
    %192 = vmatpush1.msra.mxu0 0.0
    %193 = vmatprep.subr.mxu0 0.0
    %194 = vmatpush1.msra.mxu0 0.0
    %195 = vmatprep.subr.mxu0 0.0
    %196 = vmatpush1.msra.mxu0 0.0
    %197 = vmatprep.subr.mxu0 0.0
    %198 = vmatpush1.msra.mxu0 0.0
    %199 = vmatprep.subr.mxu0 0.0
    %200 = vmatpush1.msra.mxu0 0.0
    %201 = vmatprep.subr.mxu0 0.0
    %202 = vmatpush1.msra.mxu0 0.0
    %203 = vmatprep.subr.mxu0 0.0
    %204 = vmatpush1.msra.mxu0 0.0
    %205 = vmatprep.subr.mxu0 0.0
    %206 = vmatpush1.msra.mxu0 0.0
    %207 = vmatprep.subr.mxu0 0.0
    %208 = vmatpush1.msra.mxu0 0.0
    %209 = vmatprep.subr.mxu0 0.0
    %210 = vmatpush1.msra.mxu0 0.0
    %211 = vmatprep.subr.mxu0 0.0
    %212 = vmatpush1.msra.mxu0 0.0
    %213 = vmatprep.subr.mxu0 0.0
    %214 = vmatpush1.msra.mxu0 0.0
    %215 = vmatprep.mubr.f32.mxu0 %v146
    %216 = vmatmul.mubr.f32.gmra.mrb[0].mxu0 %v46
    %v217 = vpop.f32.mrb[0].mxu0
    %v218 = vadd.f32 %v127, %v217
    %v219 = vpop.f32.mrb[0].mxu0
    %v220 = vadd.f32 %v131, %v219
    %221 = vmatprep.mubr.f32.mxu0 %v149
    %222 = vmatmul.mubr.f32.gmra.mrb[0].mxu0 %v48
    %v223 = vpop.f32.mrb[0].mxu0
    %v224 = vadd.f32 %v127, %v223
    %v225 = vpop.f32.mrb[0].mxu0
    %v226 = vadd.f32 %v131, %v225
    %227 = vdwg.mxu0
    %228 = vmatprep.subr.mxu0 %v53
    %229 = vmatpush1.msra.mxu0 %v52
    %230 = vmatprep.subr.mxu0 %v57
    %231 = vmatpush1.msra.mxu0 %v56
    %232 = vmatprep.subr.mxu0 %v61
    %233 = vmatpush1.msra.mxu0 %v60
    %234 = vmatprep.subr.mxu0 %v65
    %235 = vmatpush1.msra.mxu0 %v64
    %236 = vmatprep.subr.mxu0 %v69
    %237 = vmatpush1.msra.mxu0 %v68
    %238 = vmatprep.subr.mxu0 %v73
    %239 = vmatpush1.msra.mxu0 %v72
    %240 = vmatprep.subr.mxu0 %v77
    %241 = vmatpush1.msra.mxu0 %v76
    %242 = vmatprep.subr.mxu0 %v81
    %243 = vmatpush1.msra.mxu0 %v80
    %244 = vmatprep.subr.mxu0 %v85
    %245 = vmatpush1.msra.mxu0 %v84
    %246 = vmatprep.subr.mxu0 %v89
    %247 = vmatpush1.msra.mxu0 %v88
    %248 = vmatprep.subr.mxu0 %v93
    %249 = vmatpush1.msra.mxu0 %v92
    %250 = vmatprep.subr.mxu0 %v97
    %251 = vmatpush1.msra.mxu0 %v96
    %252 = vmatprep.subr.mxu0 %v101
    %253 = vmatpush1.msra.mxu0 %v100
    %254 = vmatprep.subr.mxu0 %v105
    %255 = vmatpush1.msra.mxu0 %v104
    %256 = vmatprep.subr.mxu0 %v109
    %257 = vmatpush1.msra.mxu0 %v108
    %258 = vmatprep.subr.mxu0 %v113
    %259 = vmatpush1.msra.mxu0 %v112
    %260 = vmatprep.subr.mxu0 %v117
    %261 = vmatpush1.msra.mxu0 %v116
    %262 = vmatprep.subr.mxu0 %v121
    %263 = vmatpush1.msra.mxu0 %v120
    %264 = vmatprep.subr.mxu0 0.0
    %265 = vmatpush1.msra.mxu0 0.0
    %266 = vmatprep.subr.mxu0 0.0
    %267 = vmatpush1.msra.mxu0 0.0
    %268 = vmatprep.subr.mxu0 0.0
    %269 = vmatpush1.msra.mxu0 0.0
    %270 = vmatprep.subr.mxu0 0.0
    %271 = vmatpush1.msra.mxu0 0.0
    %272 = vmatprep.subr.mxu0 0.0
    %273 = vmatpush1.msra.mxu0 0.0
    %274 = vmatprep.subr.mxu0 0.0
    %275 = vmatpush1.msra.mxu0 0.0
    %276 = vmatprep.subr.mxu0 0.0
    %277 = vmatpush1.msra.mxu0 0.0
    %278 = vmatprep.subr.mxu0 0.0
    %279 = vmatpush1.msra.mxu0 0.0
    %280 = vmatprep.subr.mxu0 0.0
    %281 = vmatpush1.msra.mxu0 0.0
    %282 = vmatprep.subr.mxu0 0.0
    %283 = vmatpush1.msra.mxu0 0.0
    %284 = vmatprep.subr.mxu0 0.0
    %285 = vmatpush1.msra.mxu0 0.0
    %286 = vmatprep.subr.mxu0 0.0
    %287 = vmatpush1.msra.mxu0 0.0
    %288 = vmatprep.subr.mxu0 0.0
    %289 = vmatpush1.msra.mxu0 0.0
    %290 = vmatprep.subr.mxu0 0.0
    %291 = vmatpush1.msra.mxu0 0.0
    %292 = vmatprep.mubr.f32.mxu0 %v146
    %293 = vmatmul.mubr.f32.gmra.mrb[0].mxu0 %v46
    %v294 = vpop.f32.mrb[0].mxu0
    %v295 = vadd.f32 %v135, %v294
    %v296 = vpop.f32.mrb[0].mxu0
    %v297 = vadd.f32 %v139, %v296
    %298 = vmatprep.mubr.f32.mxu0 %v149
    %299 = vmatmul.mubr.f32.gmra.mrb[0].mxu0 %v48
    %v300 = vpop.f32.mrb[0].mxu0
    %v301 = vadd.f32 %v135, %v300
    %v302 = vpop.f32.mrb[0].mxu0
    %v303 = vadd.f32 %v139, %v302
    %304 = vdwg.mxu0
    %v305 = vxor.u32 %v218, 2147483648
    %v306 = vxor.u32 %v224, 2147483648
    %v307 = vmul.f32 %v305, 1.442695
    %v308 = vpow.pop %v307
    %v309 = vmul.f32 %v306, 1.442695
    %v310 = vpow.pop %v309
    %v311 = vadd.f32 %v308, 1.0
    %v312 = vadd.f32 %v310, 1.0
    %v313 = vrcp.pop %v311
    %v314 = vmul.f32 1.0, %v313
    %v315 = vrcp.pop %v312
    %v316 = vmul.f32 1.0, %v315
    %v317 = vxor.u32 %v220, 2147483648
    %v318 = vxor.u32 %v226, 2147483648
    %v319 = vmul.f32 %v317, 1.442695
    %v320 = vpow.pop %v319
    %v321 = vmul.f32 %v318, 1.442695
    %v322 = vpow.pop %v321
    %v323 = vadd.f32 %v320, 1.0
    %v324 = vadd.f32 %v322, 1.0
    %v325 = vrcp.pop %v323
    %v326 = vmul.f32 1.0, %v325
    %v327 = vrcp.pop %v324
    %v328 = vmul.f32 1.0, %v327
    %v329 = vld [vmem:[%s3] sm:$0x1]
    %v331 = vlaneseq
    %v332 = vshrl.u32 %v331, 7
    %v333 = vsub.s32 0, %v332
    %v334 = vrot.slane %v329, %v333
    %v336 = vadd.f32 %v297, %v334
    %v337 = vadd.f32 %v303, %v334
    %v338 = vmul.f32 %v314, %v336
    %v339 = vmul.f32 %v316, %v337
    %v340 = vadd.f32 %v295, %v338
    %v341 = vadd.f32 %v301, %v339
    %v342 = vtanh.pop %v340
    %v343 = vtanh.pop %v341
    %v344 = vsub.f32 %v46, %v342
    %v345 = vsub.f32 %v48, %v343
    %v346 = vmul.f32 %v326, %v344
    %v347 = vmul.f32 %v328, %v345
    %v348 = vadd.f32 %v342, %v346
    %v349 = vadd.f32 %v343, %v347
    %350 = vst [vmem:[#allocation7] sm:$0xff] %v348
    %351 = vst [vmem:[#allocation7 + $0x8] sm:$0xff] %v349
    // Predicated region
    $region26: #{tpu_custom_call.1} parent=1 // pred_check
      _
    $region27: #{tpu_custom_call.1} parent=1 // pred_check_branch
      %353 = sbr.rel (0) target = $region29
    $region28: #{tpu_custom_call.1} parent=1 // pred_region
      %s355 = ssub.s32 256, 256
      %356 = vsyncadd [#allocation4], %s355
      %s357 = sshll.u32 [#allocation7], 4
      %s358 = int_to_ptr.vmem [resolvable:$true] %s357
      %363 = dma.vmem_to_hbm [thread:$0]  %s358, 256, %s4, [#allocation4], 128, 128, 8
    $region29: #{tpu_custom_call.1} parent=1 // pred_fallthru
      _
    // Predicated region
    $region30: #{tpu_custom_call.1} parent=1 // pred_check
      _
    $region31: #{tpu_custom_call.1} parent=1 // pred_check_branch
      %365 = sbr.rel (0) target = $region33
    $region32: #{tpu_custom_call.1} parent=1 // pred_region
      %366 = dma.done [#allocation4], 256
    $region33: #{tpu_custom_call.1} parent=1 // pred_fallthru
      _
    %367 = vsyncpa [#allocation3], 1
    %368 = vsyncpa [#allocation6], 1
    %369 = vsyncpa [#allocation4], 1

// kernel: tpu_custom_call.1
$region0: #{tpu_custom_call.1}
  #allocation0 [shape = 'u32[]', space=smem, size = 0x4, offset = 0x4, fixed_abs, tag = 'smem constant byte address 0x4 - core index']
  #allocation1 [shape = 'u32[144,128]{1,0:T(1,128)}', space=vmem, size = 0x12000, scoped, tag = 'internal scratch']
  %s0 = inlined_call_operand.hbm [shape: f32[16,144], index: 0, kind: input, shape index: {}]
  %s1 = inlined_call_operand.hbm [shape: f32[144,512], index: 1, kind: input, shape index: {}]
  %s2 = inlined_call_operand.vmem [shape: f32[1,512], index: 2, kind: input, shape index: {}]
  %s3 = inlined_call_operand.vmem [shape: f32[1,128], index: 3, kind: input, shape index: {}]
  %s4 = inlined_call_operand.hbm [shape: f32[16,128], index: 4, kind: output, shape index: {}]
  %s5 = sld [smem:[#allocation0]]
  $region34: #{tpu_custom_call.1} parent=0
    _
  %s7 = ssub.s32 1, %s5
  %s8 = scalar_select 0, %s7, %s5
  $region1: #{tpu_custom_call.1} parent=0
    #allocation2 [shape = 'u8[16384]{0}', space=vmem, size = 0x4000, scoped, tag = 'input window, operand 0, single buffered']
    #allocation3 [shape = 's32[1]{0}', space=sflag, size = 0x4, scoped, tag = 'scoped memory for tpu_custom_call.1']
    #allocation4 [shape = 's32[1]{0}', space=sflag, size = 0x4, scoped, tag = 'scoped memory for tpu_custom_call.1']
    #allocation5 [shape = 'u8[294912]{0}', space=vmem, size = 0x48000, scoped, tag = 'input window, operand 1, single buffered']
    #allocation6 [shape = 's32[1]{0}', space=sflag, size = 0x4, scoped, tag = 'scoped memory for tpu_custom_call.1']
    #allocation7 [shape = 'u8[8192]{0}', space=vmem, size = 0x2000, scoped, tag = 'output window, operand 0, single buffered']
    %9 = vsyncpa [#allocation3], 0
    %10 = vsyncpa [#allocation6], 0
    %11 = vsyncpa [#allocation4], 0
    // Predicated region
    $region2: #{tpu_custom_call.1} parent=1 // pred_check
      _
    $region3: #{tpu_custom_call.1} parent=1 // pred_check_branch
      %13 = sbr.rel (0) target = $region5
    $region4: #{tpu_custom_call.1} parent=1 // pred_region
      %s15 = ssub.s32 512, 512
      %16 = vsyncadd [#allocation3], %s15
      %s17 = sshll.u32 [#allocation2], 4
      %s18 = int_to_ptr.vmem [resolvable:$true] %s17
      %23 = dma.hbm_to_vmem [thread:$0]  %s0, 512, %s18, [#allocation3], 256, 256, 16
    $region5: #{tpu_custom_call.1} parent=1 // pred_fallthru
      _
    // Predicated region
    $region6: #{tpu_custom_call.1} parent=1 // pred_check
      _
    $region7: #{tpu_custom_call.1} parent=1 // pred_check_branch
      %25 = sbr.rel (0) target = $region9
    $region8: #{tpu_custom_call.1} parent=1 // pred_region
      %s27 = ssub.s32 9216, 9216
      %28 = vsyncadd [#allocation6], %s27
      %s29 = sshll.u32 [#allocation5], 4
      %s30 = int_to_ptr.vmem [resolvable:$true] %s29
      %35 = dma.hbm_to_vmem [thread:$0]  %s1, 9216, %s30, [#allocation6], 512, 512, 32
    $region9: #{tpu_custom_call.1} parent=1 // pred_fallthru
      _
    // Predicated region
    $region10: #{tpu_custom_call.1} parent=1 // pred_check
      _
    $region11: #{tpu_custom_call.1} parent=1 // pred_check_branch
      %37 = sbr.rel (0) target = $region13
    $region12: #{tpu_custom_call.1} parent=1 // pred_region
      _
    $region13: #{tpu_custom_call.1} parent=1 // pred_fallthru
      _
    // Predicated region
    $region14: #{tpu_custom_call.1} parent=1 // pred_check
      _
    $region15: #{tpu_custom_call.1} parent=1 // pred_check_branch
      %39 = sbr.rel (0) target = $region17
    $region16: #{tpu_custom_call.1} parent=1 // pred_region
      _
    $region17: #{tpu_custom_call.1} parent=1 // pred_fallthru
      _
    // Predicated region
    $region18: #{tpu_custom_call.1} parent=1 // pred_check
      _
    $region19: #{tpu_custom_call.1} parent=1 // pred_check_branch
      %41 = sbr.rel (0) target = $region21
    $region20: #{tpu_custom_call.1} parent=1 // pred_region
      %42 = dma.done [#allocation3], 512
    $region21: #{tpu_custom_call.1} parent=1 // pred_fallthru
      _
    // Predicated region
    $region22: #{tpu_custom_call.1} parent=1 // pred_check
      _
    $region23: #{tpu_custom_call.1} parent=1 // pred_check_branch
      %44 = sbr.rel (0) target = $region25
    $region24: #{tpu_custom_call.1} parent=1 // pred_region
      %45 = dma.done [#allocation6], 9216
    $region25: #{tpu_custom_call.1} parent=1 // pred_fallthru
      _
    %v46 = vld [vmem:[#allocation2] sm:$0xff]
    %v47 = vld [vmem:[#allocation2 + $0x8] sm:$0xff]
    %v48 = vld [vmem:[#allocation2 + $0x10] sm:$0xff]
    %v49 = vld [vmem:[#allocation2 + $0x18] sm:$0xff]
    %v50 = vld [vmem:[#allocation5] sm:$0xff]
    %v51 = vld [vmem:[#allocation5 + $0x8] sm:$0xff]
    %v52 = vld [vmem:[#allocation5 + $0x10] sm:$0xff]
    %v53 = vld [vmem:[#allocation5 + $0x18] sm:$0xff]
    %v54 = vld [vmem:[#allocation5 + $0x20] sm:$0xff]
    %v55 = vld [vmem:[#allocation5 + $0x28] sm:$0xff]
    %v56 = vld [vmem:[#allocation5 + $0x30] sm:$0xff]
    %v57 = vld [vmem:[#allocation5 + $0x38] sm:$0xff]
    %v58 = vld [vmem:[#allocation5 + $0x40] sm:$0xff]
    %v59 = vld [vmem:[#allocation5 + $0x48] sm:$0xff]
    %v60 = vld [vmem:[#allocation5 + $0x50] sm:$0xff]
    %v61 = vld [vmem:[#allocation5 + $0x58] sm:$0xff]
    %v62 = vld [vmem:[#allocation5 + $0x60] sm:$0xff]
    %v63 = vld [vmem:[#allocation5 + $0x68] sm:$0xff]
    %v64 = vld [vmem:[#allocation5 + $0x70] sm:$0xff]
    %v65 = vld [vmem:[#allocation5 + $0x78] sm:$0xff]
    %v66 = vld [vmem:[#allocation5 + $0x80] sm:$0xff]
    %v67 = vld [vmem:[#allocation5 + $0x88] sm:$0xff]
    %v68 = vld [vmem:[#allocation5 + $0x90] sm:$0xff]
    %v69 = vld [vmem:[#allocation5 + $0x98] sm:$0xff]
    %v70 = vld [vmem:[#allocation5 + $0xa0] sm:$0xff]
    %v71 = vld [vmem:[#allocation5 + $0xa8] sm:$0xff]
    %v72 = vld [vmem:[#allocation5 + $0xb0] sm:$0xff]
    %v73 = vld [vmem:[#allocation5 + $0xb8] sm:$0xff]
    %v74 = vld [vmem:[#allocation5 + $0xc0] sm:$0xff]
    %v75 = vld [vmem:[#allocation5 + $0xc8] sm:$0xff]
    %v76 = vld [vmem:[#allocation5 + $0xd0] sm:$0xff]
    %v77 = vld [vmem:[#allocation5 + $0xd8] sm:$0xff]
    %v78 = vld [vmem:[#allocation5 + $0xe0] sm:$0xff]
    %v79 = vld [vmem:[#allocation5 + $0xe8] sm:$0xff]
    %v80 = vld [vmem:[#allocation5 + $0xf0] sm:$0xff]
    %v81 = vld [vmem:[#allocation5 + $0xf8] sm:$0xff]
    %v82 = vld [vmem:[#allocation5 + $0x100] sm:$0xff]
    %v83 = vld [vmem:[#allocation5 + $0x108] sm:$0xff]
    %v84 = vld [vmem:[#allocation5 + $0x110] sm:$0xff]
    %v85 = vld [vmem:[#allocation5 + $0x118] sm:$0xff]
    %v86 = vld [vmem:[#allocation5 + $0x120] sm:$0xff]
    %v87 = vld [vmem:[#allocation5 + $0x128] sm:$0xff]
    %v88 = vld [vmem:[#allocation5 + $0x130] sm:$0xff]
    %v89 = vld [vmem:[#allocation5 + $0x138] sm:$0xff]
    %v90 = vld [vmem:[#allocation5 + $0x140] sm:$0xff]
    %v91 = vld [vmem:[#allocation5 + $0x148] sm:$0xff]
    %v92 = vld [vmem:[#allocation5 + $0x150] sm:$0xff]
    %v93 = vld [vmem:[#allocation5 + $0x158] sm:$0xff]
    %v94 = vld [vmem:[#allocation5 + $0x160] sm:$0xff]
    %v95 = vld [vmem:[#allocation5 + $0x168] sm:$0xff]
    %v96 = vld [vmem:[#allocation5 + $0x170] sm:$0xff]
    %v97 = vld [vmem:[#allocation5 + $0x178] sm:$0xff]
    %v98 = vld [vmem:[#allocation5 + $0x180] sm:$0xff]
    %v99 = vld [vmem:[#allocation5 + $0x188] sm:$0xff]
    %v100 = vld [vmem:[#allocation5 + $0x190] sm:$0xff]
    %v101 = vld [vmem:[#allocation5 + $0x198] sm:$0xff]
    %v102 = vld [vmem:[#allocation5 + $0x1a0] sm:$0xff]
    %v103 = vld [vmem:[#allocation5 + $0x1a8] sm:$0xff]
    %v104 = vld [vmem:[#allocation5 + $0x1b0] sm:$0xff]
    %v105 = vld [vmem:[#allocation5 + $0x1b8] sm:$0xff]
    %v106 = vld [vmem:[#allocation5 + $0x1c0] sm:$0xff]
    %v107 = vld [vmem:[#allocation5 + $0x1c8] sm:$0xff]
    %v108 = vld [vmem:[#allocation5 + $0x1d0] sm:$0xff]
    %v109 = vld [vmem:[#allocation5 + $0x1d8] sm:$0xff]
    %v110 = vld [vmem:[#allocation5 + $0x1e0] sm:$0xff]
    %v111 = vld [vmem:[#allocation5 + $0x1e8] sm:$0xff]
    %v112 = vld [vmem:[#allocation5 + $0x1f0] sm:$0xff]
    %v113 = vld [vmem:[#allocation5 + $0x1f8] sm:$0xff]
    %v114 = vld [vmem:[#allocation5 + $0x200] sm:$0xff]
    %v115 = vld [vmem:[#allocation5 + $0x208] sm:$0xff]
    %v116 = vld [vmem:[#allocation5 + $0x210] sm:$0xff]
    %v117 = vld [vmem:[#allocation5 + $0x218] sm:$0xff]
    %v118 = vld [vmem:[#allocation5 + $0x220] sm:$0xff]
    %v119 = vld [vmem:[#allocation5 + $0x228] sm:$0xff]
    %v120 = vld [vmem:[#allocation5 + $0x230] sm:$0xff]
    %v121 = vld [vmem:[#allocation5 + $0x238] sm:$0xff]
    %v122 = vld [vmem:[%s2] sm:$0xf]
    %v124 = vlaneseq
    %v125 = vshrl.u32 %v124, 7
    %v126 = vsub.s32 0, %v125
    %v127 = vrot.slane %v122, %v126
    %v128 = vlaneseq
    %v129 = vshrl.u32 %v128, 7
    %v130 = vsub.s32 1, %v129
    %v131 = vrot.slane %v122, %v130
    %v132 = vlaneseq
    %v133 = vshrl.u32 %v132, 7
    %v134 = vsub.s32 2, %v133
    %v135 = vrot.slane %v122, %v134
    %v136 = vlaneseq
    %v137 = vshrl.u32 %v136, 7
    %v138 = vsub.s32 3, %v137
    %v139 = vrot.slane %v122, %v138
    %vm144 = vcmask 130048
    %v146 = vsel %vm144, %v47, 0
    %v149 = vsel %vm144, %v49, 0
    %151 = vmatprep.subr.mxu0 %v51
    %152 = vmatpush1.msra.mxu0 %v50
    %153 = vmatprep.subr.mxu0 %v55
    %154 = vmatpush1.msra.mxu0 %v54
    %155 = vmatprep.subr.mxu0 %v59
    %156 = vmatpush1.msra.mxu0 %v58
    %157 = vmatprep.subr.mxu0 %v63
    %158 = vmatpush1.msra.mxu0 %v62
    %159 = vmatprep.subr.mxu0 %v67
    %160 = vmatpush1.msra.mxu0 %v66
    %161 = vmatprep.subr.mxu0 %v71
    %162 = vmatpush1.msra.mxu0 %v70
    %163 = vmatprep.subr.mxu0 %v75
    %164 = vmatpush1.msra.mxu0 %v74
    %165 = vmatprep.subr.mxu0 %v79
    %166 = vmatpush1.msra.mxu0 %v78
    %167 = vmatprep.subr.mxu0 %v83
    %168 = vmatpush1.msra.mxu0 %v82
    %169 = vmatprep.subr.mxu0 %v87
    %170 = vmatpush1.msra.mxu0 %v86
    %171 = vmatprep.subr.mxu0 %v91
    %172 = vmatpush1.msra.mxu0 %v90
    %173 = vmatprep.subr.mxu0 %v95
    %174 = vmatpush1.msra.mxu0 %v94
    %175 = vmatprep.subr.mxu0 %v99
    %176 = vmatpush1.msra.mxu0 %v98
    %177 = vmatprep.subr.mxu0 %v103
    %178 = vmatpush1.msra.mxu0 %v102
    %179 = vmatprep.subr.mxu0 %v107
    %180 = vmatpush1.msra.mxu0 %v106
    %181 = vmatprep.subr.mxu0 %v111
    %182 = vmatpush1.msra.mxu0 %v110
    %183 = vmatprep.subr.mxu0 %v115
    %184 = vmatpush1.msra.mxu0 %v114
    %185 = vmatprep.subr.mxu0 %v119
    %186 = vmatpush1.msra.mxu0 %v118
    %187 = vmatprep.subr.mxu0 0.0
    %188 = vmatpush1.msra.mxu0 0.0
    %189 = vmatprep.subr.mxu0 0.0
    %190 = vmatpush1.msra.mxu0 0.0
    %191 = vmatprep.subr.mxu0 0.0
    %192 = vmatpush1.msra.mxu0 0.0
    %193 = vmatprep.subr.mxu0 0.0
    %194 = vmatpush1.msra.mxu0 0.0
    %195 = vmatprep.subr.mxu0 0.0
    %196 = vmatpush1.msra.mxu0 0.0
    %197 = vmatprep.subr.mxu0 0.0
    %198 = vmatpush1.msra.mxu0 0.0
    %199 = vmatprep.subr.mxu0 0.0
    %200 = vmatpush1.msra.mxu0 0.0
    %201 = vmatprep.subr.mxu0 0.0
    %202 = vmatpush1.msra.mxu0 0.0
    %203 = vmatprep.subr.mxu0 0.0
    %204 = vmatpush1.msra.mxu0 0.0
    %205 = vmatprep.subr.mxu0 0.0
    %206 = vmatpush1.msra.mxu0 0.0
    %207 = vmatprep.subr.mxu0 0.0
    %208 = vmatpush1.msra.mxu0 0.0
    %209 = vmatprep.subr.mxu0 0.0
    %210 = vmatpush1.msra.mxu0 0.0
    %211 = vmatprep.subr.mxu0 0.0
    %212 = vmatpush1.msra.mxu0 0.0
    %213 = vmatprep.subr.mxu0 0.0
    %214 = vmatpush1.msra.mxu0 0.0
    %215 = vmatprep.mubr.f32.mxu0 %v146
    %216 = vmatmul.mubr.f32.gmra.mrb[0].mxu0 %v46
    %v217 = vpop.f32.mrb[0].mxu0
    %v218 = vadd.f32 %v127, %v217
    %v219 = vpop.f32.mrb[0].mxu0
    %v220 = vadd.f32 %v131, %v219
    %221 = vmatprep.mubr.f32.mxu0 %v149
    %222 = vmatmul.mubr.f32.gmra.mrb[0].mxu0 %v48
    %v223 = vpop.f32.mrb[0].mxu0
    %v224 = vadd.f32 %v127, %v223
    %v225 = vpop.f32.mrb[0].mxu0
    %v226 = vadd.f32 %v131, %v225
    %227 = vdwg.mxu0
    %228 = vmatprep.subr.mxu0 %v53
    %229 = vmatpush1.msra.mxu0 %v52
    %230 = vmatprep.subr.mxu0 %v57
    %231 = vmatpush1.msra.mxu0 %v56
    %232 = vmatprep.subr.mxu0 %v61
    %233 = vmatpush1.msra.mxu0 %v60
    %234 = vmatprep.subr.mxu0 %v65
    %235 = vmatpush1.msra.mxu0 %v64
    %236 = vmatprep.subr.mxu0 %v69
    %237 = vmatpush1.msra.mxu0 %v68
    %238 = vmatprep.subr.mxu0 %v73
    %239 = vmatpush1.msra.mxu0 %v72
    %240 = vmatprep.subr.mxu0 %v77
    %241 = vmatpush1.msra.mxu0 %v76
    %242 = vmatprep.subr.mxu0 %v81
    %243 = vmatpush1.msra.mxu0 %v80
    %244 = vmatprep.subr.mxu0 %v85
    %245 = vmatpush1.msra.mxu0 %v84
    %246 = vmatprep.subr.mxu0 %v89
    %247 = vmatpush1.msra.mxu0 %v88
    %248 = vmatprep.subr.mxu0 %v93
    %249 = vmatpush1.msra.mxu0 %v92
    %250 = vmatprep.subr.mxu0 %v97
    %251 = vmatpush1.msra.mxu0 %v96
    %252 = vmatprep.subr.mxu0 %v101
    %253 = vmatpush1.msra.mxu0 %v100
    %254 = vmatprep.subr.mxu0 %v105
    %255 = vmatpush1.msra.mxu0 %v104
    %256 = vmatprep.subr.mxu0 %v109
    %257 = vmatpush1.msra.mxu0 %v108
    %258 = vmatprep.subr.mxu0 %v113
    %259 = vmatpush1.msra.mxu0 %v112
    %260 = vmatprep.subr.mxu0 %v117
    %261 = vmatpush1.msra.mxu0 %v116
    %262 = vmatprep.subr.mxu0 %v121
    %263 = vmatpush1.msra.mxu0 %v120
    %264 = vmatprep.subr.mxu0 0.0
    %265 = vmatpush1.msra.mxu0 0.0
    %266 = vmatprep.subr.mxu0 0.0
    %267 = vmatpush1.msra.mxu0 0.0
    %268 = vmatprep.subr.mxu0 0.0
    %269 = vmatpush1.msra.mxu0 0.0
    %270 = vmatprep.subr.mxu0 0.0
    %271 = vmatpush1.msra.mxu0 0.0
    %272 = vmatprep.subr.mxu0 0.0
    %273 = vmatpush1.msra.mxu0 0.0
    %274 = vmatprep.subr.mxu0 0.0
    %275 = vmatpush1.msra.mxu0 0.0
    %276 = vmatprep.subr.mxu0 0.0
    %277 = vmatpush1.msra.mxu0 0.0
    %278 = vmatprep.subr.mxu0 0.0
    %279 = vmatpush1.msra.mxu0 0.0
    %280 = vmatprep.subr.mxu0 0.0
    %281 = vmatpush1.msra.mxu0 0.0
    %282 = vmatprep.subr.mxu0 0.0
    %283 = vmatpush1.msra.mxu0 0.0
    %284 = vmatprep.subr.mxu0 0.0
    %285 = vmatpush1.msra.mxu0 0.0
    %286 = vmatprep.subr.mxu0 0.0
    %287 = vmatpush1.msra.mxu0 0.0
    %288 = vmatprep.subr.mxu0 0.0
    %289 = vmatpush1.msra.mxu0 0.0
    %290 = vmatprep.subr.mxu0 0.0
    %291 = vmatpush1.msra.mxu0 0.0
    %292 = vmatprep.mubr.f32.mxu0 %v146
    %293 = vmatmul.mubr.f32.gmra.mrb[0].mxu0 %v46
    %v294 = vpop.f32.mrb[0].mxu0
    %v295 = vadd.f32 %v135, %v294
    %v296 = vpop.f32.mrb[0].mxu0
    %v297 = vadd.f32 %v139, %v296
    %298 = vmatprep.mubr.f32.mxu0 %v149
    %299 = vmatmul.mubr.f32.gmra.mrb[0].mxu0 %v48
    %v300 = vpop.f32.mrb[0].mxu0
    %v301 = vadd.f32 %v135, %v300
    %v302 = vpop.f32.mrb[0].mxu0
    %v303 = vadd.f32 %v139, %v302
    %304 = vdwg.mxu0
    %v305 = vxor.u32 %v218, 2147483648
    %v306 = vxor.u32 %v224, 2147483648
    %v307 = vmul.f32 %v305, 1.442695
    %v308 = vpow.pop %v307
    %v309 = vmul.f32 %v306, 1.442695
    %v310 = vpow.pop %v309
    %v311 = vadd.f32 %v308, 1.0
    %v312 = vadd.f32 %v310, 1.0
    %v313 = vrcp.pop %v311
    %v314 = vmul.f32 1.0, %v313
    %v315 = vrcp.pop %v312
    %v316 = vmul.f32 1.0, %v315
    %v317 = vxor.u32 %v220, 2147483648
    %v318 = vxor.u32 %v226, 2147483648
    %v319 = vmul.f32 %v317, 1.442695
    %v320 = vpow.pop %v319
    %v321 = vmul.f32 %v318, 1.442695
    %v322 = vpow.pop %v321
    %v323 = vadd.f32 %v320, 1.0
    %v324 = vadd.f32 %v322, 1.0
    %v325 = vrcp.pop %v323
    %v326 = vmul.f32 1.0, %v325
    %v327 = vrcp.pop %v324
    %v328 = vmul.f32 1.0, %v327
    %v329 = vld [vmem:[%s3] sm:$0x1]
    %v331 = vlaneseq
    %v332 = vshrl.u32 %v331, 7
    %v333 = vsub.s32 0, %v332
    %v334 = vrot.slane %v329, %v333
    %v336 = vadd.f32 %v297, %v334
    %v337 = vadd.f32 %v303, %v334
    %v338 = vmul.f32 %v314, %v336
    %v339 = vmul.f32 %v316, %v337
    %v340 = vadd.f32 %v295, %v338
    %v341 = vadd.f32 %v301, %v339
    %v342 = vtanh.pop %v340
    %v343 = vtanh.pop %v341
    %v344 = vsub.f32 %v46, %v342
    %v345 = vsub.f32 %v48, %v343
    %v346 = vmul.f32 %v326, %v344
    %v347 = vmul.f32 %v328, %v345
    %v348 = vadd.f32 %v342, %v346
    %v349 = vadd.f32 %v343, %v347
    %350 = vst [vmem:[#allocation7] sm:$0xff] %v348
    %351 = vst [vmem:[#allocation7 + $0x8] sm:$0xff] %v349
    // Predicated region
    $region26: #{tpu_custom_call.1} parent=1 // pred_check
      _
    $region27: #{tpu_custom_call.1} parent=1 // pred_check_branch
      %353 = sbr.rel (0) target = $region29
    $region28: #{tpu_custom_call.1} parent=1 // pred_region
      %s355 = ssub.s32 256, 256
      %356 = vsyncadd [#allocation4], %s355
      %s357 = sshll.u32 [#allocation7], 4
      %s358 = int_to_ptr.vmem [resolvable:$true] %s357
      %363 = dma.vmem_to_hbm [thread:$0]  %s358, 256, %s4, [#allocation4], 128, 128, 8
    $region29: #{tpu_custom_call.1} parent=1 // pred_fallthru
      _
    // Predicated region
    $region30: #{tpu_custom_call.1} parent=1 // pred_check
      _
    $region31: #{tpu_custom_call.1} parent=1 // pred_check_branch
      %365 = sbr.rel (0) target = $region33
    $region32: #{tpu_custom_call.1} parent=1 // pred_region
      %366 = dma.done [#allocation4], 256
    $region33: #{tpu_custom_call.1} parent=1 // pred_fallthru
      _
    %367 = vsyncpa [#allocation3], 1
    %368 = vsyncpa [#allocation6], 1
    %369 = vsyncpa [#allocation4], 1

</llo_original>
